<compile_context>
chip_gen: v6e
topology: v6e:2x2x1
jax: 0.10.0
libtpu: 0.0.40
codegen_flags: <defaults>
</compile_context>

<pallas_src>
import jax
import jax.numpy as jnp
import numpy as np
from jax.experimental import pallas as pl
from jax.experimental.pallas import tpu as pltpu

# ---- model hyper-params (small, consistent with the module's forward) ----
n_class = 16     # vocabulary / output classes
emb_size = 8     # embedding dim
n_hidden = 32    # LSTM hidden size
batch = 2
seq_len = 8

B_PAD = 8                    # batch padded to full sublane count
GATES = 4 * n_hidden         # 128 lanes, gate order [f, i, o, c]
LANE = 128                   # padded output-projection width
OUT_W = 2 * LANE             # packed output slab width (y | h | c | zero-pad)

# ---- packed parameter-slab layout (row offsets, all multiples of 8) ----
EMB_OFF = 0                          # rows  0..15 : embW = emb @ Wx_all + b_all (prescaled)
WH_OFF = EMB_OFF + n_class           # rows 16..47 : wh_all (prescaled)
WOUT_OFF = WH_OFF + n_hidden         # rows 48..79 : Wout padded to 128 lanes
BOUT_OFF = WOUT_OFF + n_hidden       # row  80     : bout padded to 128 lanes
GMUL_OFF = 88                        # row  88     : gate affine multiplier
GADD_OFF = 89                        # row  89     : gate affine offset
SLAB_ROWS = 96                       # (96, 128) f32  = 48 KB, one DMA


# ----------------------------- Pallas kernel -----------------------------
def lstm_kernel(xidx_ref, slab_ref, out_ref, xg_ref):
    """Embedding gather + full LSTM recurrence + output projection in VMEM.

    xidx_ref : SMEM int32 (batch*seq_len,)  row-major (b, t) token indices
    slab_ref : VMEM f32  (SLAB_ROWS, 128)   packed parameters (see layout above)
    out_ref  : VMEM f32  (B_PAD, OUT_W)     [ y(128) | h(32) | c(32) | 0(64) ]
    xg_ref   : VMEM f32  (seq_len*B_PAD, 128) scratch: per-(t,b) gate pre-activations
    """
    B = B_PAD
    H = n_hidden

    # --- prologue: gather input-path pre-activations (embedding + Wx + b folded)
    xg_ref[...] = jnp.zeros_like(xg_ref)            # deterministic pad rows
    for t in range(seq_len):
        for b in range(batch):
            idx = xidx_ref[b * seq_len + t]         # SMEM scalar read
            xg_ref[pl.ds(t * B_PAD + b, 1), :] = slab_ref[pl.ds(EMB_OFF + idx, 1), :]

    # --- hoisted parameter loads / broadcasts (JAX won't CSE inside the loop)
    wh = slab_ref[WH_OFF:WH_OFF + H, :]                                   # (32,128)
    gmul = jnp.broadcast_to(slab_ref[GMUL_OFF:GMUL_OFF + 1, :], (B, GATES))
    gadd = jnp.broadcast_to(slab_ref[GADD_OFF:GADD_OFF + 1, :], (B, GATES))

    h = jnp.zeros((B, H), jnp.float32)
    c = jnp.zeros((B, H), jnp.float32)

    # --- fully unrolled recurrence: one (B,H)@(H,4H) MXU push + one tanh per step
    for t in range(seq_len):
        xg_t = xg_ref[t * B:(t + 1) * B, :]                               # (8,128)
        if t == 0:
            z = xg_t                                 # h0 == 0: skip recurrent matmul
        else:
            z = jnp.dot(h, wh, preferred_element_type=jnp.float32) + xg_t
        # single EUP pass: sigmoid lanes recovered as 0.5*tanh(x/2)+0.5
        g = jnp.tanh(z) * gmul + gadd                                     # (8,128)
        f = g[:, 0:H]
        i = g[:, H:2 * H]
        o = g[:, 2 * H:3 * H]
        cc = g[:, 3 * H:]
        c = i * cc if t == 0 else f * c + i * cc
        h = o * jnp.tanh(c)

    # --- output projection (128 padded lanes) + direct aligned stores (no concat)
    wout = slab_ref[WOUT_OFF:WOUT_OFF + H, :]                             # (32,128)
    bout = slab_ref[BOUT_OFF:BOUT_OFF + 1, :]                             # (1,128)
    y = jnp.dot(h, wout, preferred_element_type=jnp.float32) + bout       # (8,128)

    out_ref[:, :LANE] = y
    out_ref[:, LANE:LANE + H] = h
    out_ref[:, LANE + H:LANE + 2 * H] = c
    out_ref[:, LANE + 2 * H:] = jnp.zeros((B, OUT_W - LANE - 2 * H), jnp.float32)


def lstm_pallas(x_idx_flat, slab):
    vmem = pl.BlockSpec(memory_space=pltpu.MemorySpace.VMEM)
    grid_spec = pltpu.PrefetchScalarGridSpec(
        num_scalar_prefetch=1,                       # token indices -> SMEM
        grid=(1,),
        in_specs=[vmem],
        out_specs=vmem,
        scratch_shapes=[pltpu.VMEM((seq_len * B_PAD, GATES), jnp.float32)],
    )
    return pl.pallas_call(
        lstm_kernel,
        out_shape=jax.ShapeDtypeStruct((B_PAD, OUT_W), jnp.float32),
        grid_spec=grid_spec,
        compiler_params=pltpu.CompilerParams(dimension_semantics=("arbitrary",)),
    )(x_idx_flat, slab)


# ------------------------- parameter construction ------------------------
def init_params(key):
    ks = jax.random.split(key, 11)
    in_dim = n_hidden + emb_size

    def linear(kw, kb, out_f, in_f):
        bound = 1.0 / np.sqrt(in_f)
        w = jax.random.uniform(kw, (out_f, in_f), jnp.float32, -bound, bound)
        b = jax.random.uniform(kb, (out_f,), jnp.float32, -bound, bound)
        return w, b

    emb = jax.random.normal(ks[0], (n_class, emb_size), jnp.float32)
    p = {"emb": emb}
    # Per-gate (reference) form: concat([h, x]) @ W.T + b == h @ W_h + x @ W_x + b
    for idx, g in enumerate(["f", "i", "c", "o"]):
        w, b = linear(ks[1 + 2 * idx], ks[2 + 2 * idx], n_hidden, in_dim)
        wt = w.T                                   # (in_dim, n_hidden)
        p["wh_" + g] = wt[:n_hidden]               # multiplies h
        p["wx_" + g] = wt[n_hidden:]               # multiplies x
        p["b_" + g] = b.reshape(1, n_hidden)
    w, b = linear(ks[9], ks[10], n_class, n_hidden)
    p["wout"] = w.T                                # (n_hidden, n_class)
    p["bout"] = b.reshape(1, n_class)

    # ---- packed kernel slab. Gate lane order: [f, i, o, c]. ----
    order = ["f", "i", "o", "c"]
    wh_all = jnp.concatenate([p["wh_" + g] for g in order], axis=1)   # (32,128)
    wx_all = jnp.concatenate([p["wx_" + g] for g in order], axis=1)   # (8,128)
    b_all = jnp.concatenate([p["b_" + g] for g in order], axis=1)     # (1,128)

    # sigmoid(x) = 0.5*tanh(x/2) + 0.5  -> pre-scale only f/i/o lanes by 0.5.
    gmul = jnp.concatenate([jnp.full((1, 3 * n_hidden), 0.5, jnp.float32),
                            jnp.ones((1, n_hidden), jnp.float32)], axis=1)   # (1,128)
    gadd = jnp.concatenate([jnp.full((1, 3 * n_hidden), 0.5, jnp.float32),
                            jnp.zeros((1, n_hidden), jnp.float32)], axis=1)  # (1,128)

    wh_all_s = wh_all * gmul                                           # (32,128)
    # Fold embedding, input matmul and bias into one table (prescaled).
    embW = emb @ (wx_all * gmul) + (b_all * gmul)                      # (16,128)

    wout_pad = jnp.pad(p["wout"], ((0, 0), (0, LANE - n_class)))       # (32,128)
    bout_pad = jnp.pad(p["bout"], ((0, 0), (0, LANE - n_class)))       # (1,128)

    slab = jnp.concatenate([
        embW,                                        # rows  0..15
        wh_all_s,                                    # rows 16..47
        wout_pad,                                    # rows 48..79
        bout_pad,                                    # row  80
        jnp.zeros((7, LANE), jnp.float32),           # rows 81..87
        gmul,                                        # row  88
        gadd,                                        # row  89
        jnp.zeros((6, LANE), jnp.float32),           # rows 90..95
    ], axis=0).astype(jnp.float32)
    assert slab.shape == (SLAB_ROWS, LANE)
    p["slab"] = slab
    return p


def forward(X_idx, params):
    """Full LSTM_one forward. X_idx: int32 (batch, seq). Returns (logits, (h, c))."""
    x_flat = X_idx.reshape(-1).astype(jnp.int32)     # (batch*seq,), row-major (b, t)
    out = lstm_pallas(x_flat, params["slab"])
    y = out[:batch, :n_class]
    h = out[:batch, LANE:LANE + n_hidden]
    c = out[:batch, LANE + n_hidden:LANE + 2 * n_hidden]
    return y, (h, c)


# ----------------------------- pure-JAX ref ------------------------------
def forward_ref(X_idx, params):
    x_emb = jnp.take(params["emb"], X_idx, axis=0)
    x_emb = jnp.transpose(x_emb, (1, 0, 2))
    h = jnp.zeros((batch, n_hidden), jnp.float32)
    c = jnp.zeros((batch, n_hidden), jnp.float32)
    for t in range(seq_len):
        x = x_emb[t]
        f = jax.nn.sigmoid(h @ params["wh_f"] + x @ params["wx_f"] + params["b_f"])
        i = jax.nn.sigmoid(h @ params["wh_i"] + x @ params["wx_i"] + params["b_i"])
        cc = jnp.tanh(h @ params["wh_c"] + x @ params["wx_c"] + params["b_c"])
        c = f * c + i * cc
        o = jax.nn.sigmoid(h @ params["wh_o"] + x @ params["wx_o"] + params["b_o"])
        h = o * jnp.tanh(c)
    y = h @ params["wout"] + params["bout"]
    return y, (h, c)


if __name__ == "__main__":
    key = jax.random.PRNGKey(0)
    kp, kx = jax.random.split(key)
    params = init_params(kp)

    X_idx = jax.random.randint(kx, (batch, seq_len), 0, n_class, dtype=jnp.int32)

    y, (h, c) = forward(X_idx, params)
    jax.block_until_ready((y, h, c))

    y_r, (h_r, c_r) = forward_ref(X_idx, params)
    assert np.allclose(np.asarray(y), np.asarray(y_r), atol=2e-4, rtol=2e-4)
    assert np.allclose(np.asarray(h), np.asarray(h_r), atol=2e-4, rtol=2e-4)
    assert np.allclose(np.asarray(c), np.asarray(c_r), atol=2e-4, rtol=2e-4)

    print("KERNEL_OK")
</pallas_src>

<mosaic_0001>
module attributes {stable_mosaic.version = 11 : i64} {
  func.func @lstm_kernel(%arg0: i32, %arg1: memref<16xi32, #tpu.memory_space<smem>>, %arg2: memref<96x128xf32, #tpu.memory_space<vmem>>, %arg3: memref<8x256xf32, #tpu.memory_space<vmem>>, %arg4: memref<64x128xf32, #tpu.memory_space<vmem>>) attributes {dimension_semantics = [#tpu.dimension_semantics<arbitrary>], iteration_bounds = array<i64: 1>, scalar_prefetch = 1 : i64, scratch_operands = 1 : i64, tpu.core_type = #tpu.core_type<tc>, window_params = [{pipeline_mode = #tpu.pipeline_mode<synchronous>, transform_indices = @transform_0, window_bounds = array<i64: 96, 128>}, {pipeline_mode = #tpu.pipeline_mode<synchronous>, transform_indices = @transform_1, window_bounds = array<i64: 8, 256>}]} {
    %cst = arith.constant 0.000000e+00 : f32
    %0 = vector.broadcast %cst : f32 to vector<64x128xf32>
    %c0 = arith.constant 0 : index
    %c0_0 = arith.constant 0 : index
    %1 = vector.load %arg4[%c0, %c0_0] : memref<64x128xf32, #tpu.memory_space<vmem>>, vector<64x128xf32>
    tpu.vector_store %arg4[%c0, %c0_0], %0 {strides = array<i32>} : memref<64x128xf32, #tpu.memory_space<vmem>>, vector<64x128xf32>,
    %c0_1 = arith.constant 0 : index
    %2 = memref.load %arg1[%c0_1] : memref<16xi32, #tpu.memory_space<smem>>
    %c0_i32 = arith.constant 0 : i32
    %3 = arith.addi %c0_i32, %2 : i32
    %4 = arith.index_cast %3 : i32 to index
    %c0_2 = arith.constant 0 : index
    %5 = vector.load %arg2[%4, %c0_2] : memref<96x128xf32, #tpu.memory_space<vmem>>, vector<1x128xf32>
    %c0_3 = arith.constant 0 : index
    %c0_4 = arith.constant 0 : index
    %6 = vector.load %arg4[%c0_3, %c0_4] : memref<64x128xf32, #tpu.memory_space<vmem>>, vector<1x128xf32>
    tpu.vector_store %arg4[%c0_3, %c0_4], %5 {strides = array<i32>} : memref<64x128xf32, #tpu.memory_space<vmem>>, vector<1x128xf32>,
    %c8 = arith.constant 8 : index
    %7 = memref.load %arg1[%c8] : memref<16xi32, #tpu.memory_space<smem>>
    %c0_i32_5 = arith.constant 0 : i32
    %8 = arith.addi %c0_i32_5, %7 : i32
    %9 = arith.index_cast %8 : i32 to index
    %c0_6 = arith.constant 0 : index
    %10 = vector.load %arg2[%9, %c0_6] : memref<96x128xf32, #tpu.memory_space<vmem>>, vector<1x128xf32>
    %c1 = arith.constant 1 : index
    %c0_7 = arith.constant 0 : index
    %11 = vector.load %arg4[%c1, %c0_7] : memref<64x128xf32, #tpu.memory_space<vmem>>, vector<1x128xf32>
    tpu.vector_store %arg4[%c1, %c0_7], %10 {strides = array<i32>} : memref<64x128xf32, #tpu.memory_space<vmem>>, vector<1x128xf32>,
    %c1_8 = arith.constant 1 : index
    %12 = memref.load %arg1[%c1_8] : memref<16xi32, #tpu.memory_space<smem>>
    %c0_i32_9 = arith.constant 0 : i32
    %13 = arith.addi %c0_i32_9, %12 : i32
    %14 = arith.index_cast %13 : i32 to index
    %c0_10 = arith.constant 0 : index
    %15 = vector.load %arg2[%14, %c0_10] : memref<96x128xf32, #tpu.memory_space<vmem>>, vector<1x128xf32>
    %c8_11 = arith.constant 8 : index
    %c0_12 = arith.constant 0 : index
    %16 = vector.load %arg4[%c8_11, %c0_12] : memref<64x128xf32, #tpu.memory_space<vmem>>, vector<1x128xf32>
    tpu.vector_store %arg4[%c8_11, %c0_12], %15 {strides = array<i32>} : memref<64x128xf32, #tpu.memory_space<vmem>>, vector<1x128xf32>,
    %c9 = arith.constant 9 : index
    %17 = memref.load %arg1[%c9] : memref<16xi32, #tpu.memory_space<smem>>
    %c0_i32_13 = arith.constant 0 : i32
    %18 = arith.addi %c0_i32_13, %17 : i32
    %19 = arith.index_cast %18 : i32 to index
    %c0_14 = arith.constant 0 : index
    %20 = vector.load %arg2[%19, %c0_14] : memref<96x128xf32, #tpu.memory_space<vmem>>, vector<1x128xf32>
    %c9_15 = arith.constant 9 : index
    %c0_16 = arith.constant 0 : index
    %21 = vector.load %arg4[%c9_15, %c0_16] : memref<64x128xf32, #tpu.memory_space<vmem>>, vector<1x128xf32>
    tpu.vector_store %arg4[%c9_15, %c0_16], %20 {strides = array<i32>} : memref<64x128xf32, #tpu.memory_space<vmem>>, vector<1x128xf32>,
    %c2 = arith.constant 2 : index
    %22 = memref.load %arg1[%c2] : memref<16xi32, #tpu.memory_space<smem>>
    %c0_i32_17 = arith.constant 0 : i32
    %23 = arith.addi %c0_i32_17, %22 : i32
    %24 = arith.index_cast %23 : i32 to index
    %c0_18 = arith.constant 0 : index
    %25 = vector.load %arg2[%24, %c0_18] : memref<96x128xf32, #tpu.memory_space<vmem>>, vector<1x128xf32>
    %c16 = arith.constant 16 : index
    %c0_19 = arith.constant 0 : index
    %26 = vector.load %arg4[%c16, %c0_19] : memref<64x128xf32, #tpu.memory_space<vmem>>, vector<1x128xf32>
    tpu.vector_store %arg4[%c16, %c0_19], %25 {strides = array<i32>} : memref<64x128xf32, #tpu.memory_space<vmem>>, vector<1x128xf32>,
    %c10 = arith.constant 10 : index
    %27 = memref.load %arg1[%c10] : memref<16xi32, #tpu.memory_space<smem>>
    %c0_i32_20 = arith.constant 0 : i32
    %28 = arith.addi %c0_i32_20, %27 : i32
    %29 = arith.index_cast %28 : i32 to index
    %c0_21 = arith.constant 0 : index
    %30 = vector.load %arg2[%29, %c0_21] : memref<96x128xf32, #tpu.memory_space<vmem>>, vector<1x128xf32>
    %c17 = arith.constant 17 : index
    %c0_22 = arith.constant 0 : index
    %31 = vector.load %arg4[%c17, %c0_22] : memref<64x128xf32, #tpu.memory_space<vmem>>, vector<1x128xf32>
    tpu.vector_store %arg4[%c17, %c0_22], %30 {strides = array<i32>} : memref<64x128xf32, #tpu.memory_space<vmem>>, vector<1x128xf32>,
    %c3 = arith.constant 3 : index
    %32 = memref.load %arg1[%c3] : memref<16xi32, #tpu.memory_space<smem>>
    %c0_i32_23 = arith.constant 0 : i32
    %33 = arith.addi %c0_i32_23, %32 : i32
    %34 = arith.index_cast %33 : i32 to index
    %c0_24 = arith.constant 0 : index
    %35 = vector.load %arg2[%34, %c0_24] : memref<96x128xf32, #tpu.memory_space<vmem>>, vector<1x128xf32>
    %c24 = arith.constant 24 : index
    %c0_25 = arith.constant 0 : index
    %36 = vector.load %arg4[%c24, %c0_25] : memref<64x128xf32, #tpu.memory_space<vmem>>, vector<1x128xf32>
    tpu.vector_store %arg4[%c24, %c0_25], %35 {strides = array<i32>} : memref<64x128xf32, #tpu.memory_space<vmem>>, vector<1x128xf32>,
    %c11 = arith.constant 11 : index
    %37 = memref.load %arg1[%c11] : memref<16xi32, #tpu.memory_space<smem>>
    %c0_i32_26 = arith.constant 0 : i32
    %38 = arith.addi %c0_i32_26, %37 : i32
    %39 = arith.index_cast %38 : i32 to index
    %c0_27 = arith.constant 0 : index
    %40 = vector.load %arg2[%39, %c0_27] : memref<96x128xf32, #tpu.memory_space<vmem>>, vector<1x128xf32>
    %c25 = arith.constant 25 : index
    %c0_28 = arith.constant 0 : index
    %41 = vector.load %arg4[%c25, %c0_28] : memref<64x128xf32, #tpu.memory_space<vmem>>, vector<1x128xf32>
    tpu.vector_store %arg4[%c25, %c0_28], %40 {strides = array<i32>} : memref<64x128xf32, #tpu.memory_space<vmem>>, vector<1x128xf32>,
    %c4 = arith.constant 4 : index
    %42 = memref.load %arg1[%c4] : memref<16xi32, #tpu.memory_space<smem>>
    %c0_i32_29 = arith.constant 0 : i32
    %43 = arith.addi %c0_i32_29, %42 : i32
    %44 = arith.index_cast %43 : i32 to index
    %c0_30 = arith.constant 0 : index
    %45 = vector.load %arg2[%44, %c0_30] : memref<96x128xf32, #tpu.memory_space<vmem>>, vector<1x128xf32>
    %c32 = arith.constant 32 : index
    %c0_31 = arith.constant 0 : index
    %46 = vector.load %arg4[%c32, %c0_31] : memref<64x128xf32, #tpu.memory_space<vmem>>, vector<1x128xf32>
    tpu.vector_store %arg4[%c32, %c0_31], %45 {strides = array<i32>} : memref<64x128xf32, #tpu.memory_space<vmem>>, vector<1x128xf32>,
    %c12 = arith.constant 12 : index
    %47 = memref.load %arg1[%c12] : memref<16xi32, #tpu.memory_space<smem>>
    %c0_i32_32 = arith.constant 0 : i32
    %48 = arith.addi %c0_i32_32, %47 : i32
    %49 = arith.index_cast %48 : i32 to index
    %c0_33 = arith.constant 0 : index
    %50 = vector.load %arg2[%49, %c0_33] : memref<96x128xf32, #tpu.memory_space<vmem>>, vector<1x128xf32>
    %c33 = arith.constant 33 : index
    %c0_34 = arith.constant 0 : index
    %51 = vector.load %arg4[%c33, %c0_34] : memref<64x128xf32, #tpu.memory_space<vmem>>, vector<1x128xf32>
    tpu.vector_store %arg4[%c33, %c0_34], %50 {strides = array<i32>} : memref<64x128xf32, #tpu.memory_space<vmem>>, vector<1x128xf32>,
    %c5 = arith.constant 5 : index
    %52 = memref.load %arg1[%c5] : memref<16xi32, #tpu.memory_space<smem>>
    %c0_i32_35 = arith.constant 0 : i32
    %53 = arith.addi %c0_i32_35, %52 : i32
    %54 = arith.index_cast %53 : i32 to index
    %c0_36 = arith.constant 0 : index
    %55 = vector.load %arg2[%54, %c0_36] : memref<96x128xf32, #tpu.memory_space<vmem>>, vector<1x128xf32>
    %c40 = arith.constant 40 : index
    %c0_37 = arith.constant 0 : index
    %56 = vector.load %arg4[%c40, %c0_37] : memref<64x128xf32, #tpu.memory_space<vmem>>, vector<1x128xf32>
    tpu.vector_store %arg4[%c40, %c0_37], %55 {strides = array<i32>} : memref<64x128xf32, #tpu.memory_space<vmem>>, vector<1x128xf32>,
    %c13 = arith.constant 13 : index
    %57 = memref.load %arg1[%c13] : memref<16xi32, #tpu.memory_space<smem>>
    %c0_i32_38 = arith.constant 0 : i32
    %58 = arith.addi %c0_i32_38, %57 : i32
    %59 = arith.index_cast %58 : i32 to index
    %c0_39 = arith.constant 0 : index
    %60 = vector.load %arg2[%59, %c0_39] : memref<96x128xf32, #tpu.memory_space<vmem>>, vector<1x128xf32>
    %c41 = arith.constant 41 : index
    %c0_40 = arith.constant 0 : index
    %61 = vector.load %arg4[%c41, %c0_40] : memref<64x128xf32, #tpu.memory_space<vmem>>, vector<1x128xf32>
    tpu.vector_store %arg4[%c41, %c0_40], %60 {strides = array<i32>} : memref<64x128xf32, #tpu.memory_space<vmem>>, vector<1x128xf32>,
    %c6 = arith.constant 6 : index
    %62 = memref.load %arg1[%c6] : memref<16xi32, #tpu.memory_space<smem>>
    %c0_i32_41 = arith.constant 0 : i32
    %63 = arith.addi %c0_i32_41, %62 : i32
    %64 = arith.index_cast %63 : i32 to index
    %c0_42 = arith.constant 0 : index
    %65 = vector.load %arg2[%64, %c0_42] : memref<96x128xf32, #tpu.memory_space<vmem>>, vector<1x128xf32>
    %c48 = arith.constant 48 : index
    %c0_43 = arith.constant 0 : index
    %66 = vector.load %arg4[%c48, %c0_43] : memref<64x128xf32, #tpu.memory_space<vmem>>, vector<1x128xf32>
    tpu.vector_store %arg4[%c48, %c0_43], %65 {strides = array<i32>} : memref<64x128xf32, #tpu.memory_space<vmem>>, vector<1x128xf32>,
    %c14 = arith.constant 14 : index
    %67 = memref.load %arg1[%c14] : memref<16xi32, #tpu.memory_space<smem>>
    %c0_i32_44 = arith.constant 0 : i32
    %68 = arith.addi %c0_i32_44, %67 : i32
    %69 = arith.index_cast %68 : i32 to index
    %c0_45 = arith.constant 0 : index
    %70 = vector.load %arg2[%69, %c0_45] : memref<96x128xf32, #tpu.memory_space<vmem>>, vector<1x128xf32>
    %c49 = arith.constant 49 : index
    %c0_46 = arith.constant 0 : index
    %71 = vector.load %arg4[%c49, %c0_46] : memref<64x128xf32, #tpu.memory_space<vmem>>, vector<1x128xf32>
    tpu.vector_store %arg4[%c49, %c0_46], %70 {strides = array<i32>} : memref<64x128xf32, #tpu.memory_space<vmem>>, vector<1x128xf32>,
    %c7 = arith.constant 7 : index
    %72 = memref.load %arg1[%c7] : memref<16xi32, #tpu.memory_space<smem>>
    %c0_i32_47 = arith.constant 0 : i32
    %73 = arith.addi %c0_i32_47, %72 : i32
    %74 = arith.index_cast %73 : i32 to index
    %c0_48 = arith.constant 0 : index
    %75 = vector.load %arg2[%74, %c0_48] : memref<96x128xf32, #tpu.memory_space<vmem>>, vector<1x128xf32>
    %c56 = arith.constant 56 : index
    %c0_49 = arith.constant 0 : index
    %76 = vector.load %arg4[%c56, %c0_49] : memref<64x128xf32, #tpu.memory_space<vmem>>, vector<1x128xf32>
    tpu.vector_store %arg4[%c56, %c0_49], %75 {strides = array<i32>} : memref<64x128xf32, #tpu.memory_space<vmem>>, vector<1x128xf32>,
    %c15 = arith.constant 15 : index
    %77 = memref.load %arg1[%c15] : memref<16xi32, #tpu.memory_space<smem>>
    %c0_i32_50 = arith.constant 0 : i32
    %78 = arith.addi %c0_i32_50, %77 : i32
    %79 = arith.index_cast %78 : i32 to index
    %c0_51 = arith.constant 0 : index
    %80 = vector.load %arg2[%79, %c0_51] : memref<96x128xf32, #tpu.memory_space<vmem>>, vector<1x128xf32>
    %c57 = arith.constant 57 : index
    %c0_52 = arith.constant 0 : index
    %81 = vector.load %arg4[%c57, %c0_52] : memref<64x128xf32, #tpu.memory_space<vmem>>, vector<1x128xf32>
    tpu.vector_store %arg4[%c57, %c0_52], %80 {strides = array<i32>} : memref<64x128xf32, #tpu.memory_space<vmem>>, vector<1x128xf32>,
    %c16_53 = arith.constant 16 : index
    %c0_54 = arith.constant 0 : index
    %82 = vector.load %arg2[%c16_53, %c0_54] : memref<96x128xf32, #tpu.memory_space<vmem>>, vector<32x128xf32>
    %c88 = arith.constant 88 : index
    %c0_55 = arith.constant 0 : index
    %83 = vector.load %arg2[%c88, %c0_55] : memref<96x128xf32, #tpu.memory_space<vmem>>, vector<1x128xf32>
    %84 = vector.shape_cast %83 : vector<1x128xf32> to vector<1x128xf32>
    %85 = vector.broadcast %84 : vector<1x128xf32> to vector<8x128xf32>
    %c89 = arith.constant 89 : index
    %c0_56 = arith.constant 0 : index
    %86 = vector.load %arg2[%c89, %c0_56] : memref<96x128xf32, #tpu.memory_space<vmem>>, vector<1x128xf32>
    %87 = vector.shape_cast %86 : vector<1x128xf32> to vector<1x128xf32>
    %88 = vector.broadcast %87 : vector<1x128xf32> to vector<8x128xf32>
    %c0_57 = arith.constant 0 : index
    %c0_58 = arith.constant 0 : index
    %89 = vector.load %arg4[%c0_57, %c0_58] : memref<64x128xf32, #tpu.memory_space<vmem>>, vector<8x128xf32>
    %90 = math.tanh %89 : vector<8x128xf32>
    %91 = arith.mulf %90, %85 : vector<8x128xf32>
    %92 = arith.addf %91, %88 : vector<8x128xf32>
    %93 = vector.extract_strided_slice %92 {offsets = [0, 32], sizes = [8, 32], strides = [1, 1]} : vector<8x128xf32> to vector<8x32xf32>
    %94 = vector.extract_strided_slice %92 {offsets = [0, 64], sizes = [8, 32], strides = [1, 1]} : vector<8x128xf32> to vector<8x32xf32>
    %95 = vector.extract_strided_slice %92 {offsets = [0, 96], sizes = [8, 32], strides = [1, 1]} : vector<8x128xf32> to vector<8x32xf32>
    %96 = arith.mulf %93, %95 : vector<8x32xf32>
    %97 = math.tanh %96 : vector<8x32xf32>
    %98 = arith.mulf %94, %97 : vector<8x32xf32>
    %c8_59 = arith.constant 8 : index
    %c0_60 = arith.constant 0 : index
    %99 = vector.load %arg4[%c8_59, %c0_60] : memref<64x128xf32, #tpu.memory_space<vmem>>, vector<8x128xf32>
    %cst_61 = arith.constant dense<0.000000e+00> : vector<8x128xf32>
    %100 = tpu.matmul %98, %82, %cst_61 {dimension_numbers = #tpu.dot_dimension_numbers<[1], [0], [0], [1], [0, 0, 1, 1], [], []>} : vector<8x32xf32>, vector<32x128xf32>, vector<8x128xf32> -> vector<8x128xf32>
    %101 = arith.addf %100, %99 : vector<8x128xf32>
    %102 = math.tanh %101 : vector<8x128xf32>
    %103 = arith.mulf %102, %85 : vector<8x128xf32>
    %104 = arith.addf %103, %88 : vector<8x128xf32>
    %105 = vector.extract_strided_slice %104 {offsets = [0, 0], sizes = [8, 32], strides = [1, 1]} : vector<8x128xf32> to vector<8x32xf32>
    %106 = vector.extract_strided_slice %104 {offsets = [0, 32], sizes = [8, 32], strides = [1, 1]} : vector<8x128xf32> to vector<8x32xf32>
    %107 = vector.extract_strided_slice %104 {offsets = [0, 64], sizes = [8, 32], strides = [1, 1]} : vector<8x128xf32> to vector<8x32xf32>
    %108 = vector.extract_strided_slice %104 {offsets = [0, 96], sizes = [8, 32], strides = [1, 1]} : vector<8x128xf32> to vector<8x32xf32>
    %109 = arith.mulf %105, %96 : vector<8x32xf32>
    %110 = arith.mulf %106, %108 : vector<8x32xf32>
    %111 = arith.addf %109, %110 : vector<8x32xf32>
    %112 = math.tanh %111 : vector<8x32xf32>
    %113 = arith.mulf %107, %112 : vector<8x32xf32>
    %c16_62 = arith.constant 16 : index
    %c0_63 = arith.constant 0 : index
    %114 = vector.load %arg4[%c16_62, %c0_63] : memref<64x128xf32, #tpu.memory_space<vmem>>, vector<8x128xf32>
    %cst_64 = arith.constant dense<0.000000e+00> : vector<8x128xf32>
    %115 = tpu.matmul %113, %82, %cst_64 {dimension_numbers = #tpu.dot_dimension_numbers<[1], [0], [0], [1], [0, 0, 1, 1], [], []>} : vector<8x32xf32>, vector<32x128xf32>, vector<8x128xf32> -> vector<8x128xf32>
    %116 = arith.addf %115, %114 : vector<8x128xf32>
    %117 = math.tanh %116 : vector<8x128xf32>
    %118 = arith.mulf %117, %85 : vector<8x128xf32>
    %119 = arith.addf %118, %88 : vector<8x128xf32>
    %120 = vector.extract_strided_slice %119 {offsets = [0, 0], sizes = [8, 32], strides = [1, 1]} : vector<8x128xf32> to vector<8x32xf32>
    %121 = vector.extract_strided_slice %119 {offsets = [0, 32], sizes = [8, 32], strides = [1, 1]} : vector<8x128xf32> to vector<8x32xf32>
    %122 = vector.extract_strided_slice %119 {offsets = [0, 64], sizes = [8, 32], strides = [1, 1]} : vector<8x128xf32> to vector<8x32xf32>
    %123 = vector.extract_strided_slice %119 {offsets = [0, 96], sizes = [8, 32], strides = [1, 1]} : vector<8x128xf32> to vector<8x32xf32>
    %124 = arith.mulf %120, %111 : vector<8x32xf32>
    %125 = arith.mulf %121, %123 : vector<8x32xf32>
    %126 = arith.addf %124, %125 : vector<8x32xf32>
    %127 = math.tanh %126 : vector<8x32xf32>
    %128 = arith.mulf %122, %127 : vector<8x32xf32>
    %c24_65 = arith.constant 24 : index
    %c0_66 = arith.constant 0 : index
    %129 = vector.load %arg4[%c24_65, %c0_66] : memref<64x128xf32, #tpu.memory_space<vmem>>, vector<8x128xf32>
    %cst_67 = arith.constant dense<0.000000e+00> : vector<8x128xf32>
    %130 = tpu.matmul %128, %82, %cst_67 {dimension_numbers = #tpu.dot_dimension_numbers<[1], [0], [0], [1], [0, 0, 1, 1], [], []>} : vector<8x32xf32>, vector<32x128xf32>, vector<8x128xf32> -> vector<8x128xf32>
    %131 = arith.addf %130, %129 : vector<8x128xf32>
    %132 = math.tanh %131 : vector<8x128xf32>
    %133 = arith.mulf %132, %85 : vector<8x128xf32>
    %134 = arith.addf %133, %88 : vector<8x128xf32>
    %135 = vector.extract_strided_slice %134 {offsets = [0, 0], sizes = [8, 32], strides = [1, 1]} : vector<8x128xf32> to vector<8x32xf32>
    %136 = vector.extract_strided_slice %134 {offsets = [0, 32], sizes = [8, 32], strides = [1, 1]} : vector<8x128xf32> to vector<8x32xf32>
    %137 = vector.extract_strided_slice %134 {offsets = [0, 64], sizes = [8, 32], strides = [1, 1]} : vector<8x128xf32> to vector<8x32xf32>
    %138 = vector.extract_strided_slice %134 {offsets = [0, 96], sizes = [8, 32], strides = [1, 1]} : vector<8x128xf32> to vector<8x32xf32>
    %139 = arith.mulf %135, %126 : vector<8x32xf32>
    %140 = arith.mulf %136, %138 : vector<8x32xf32>
    %141 = arith.addf %139, %140 : vector<8x32xf32>
    %142 = math.tanh %141 : vector<8x32xf32>
    %143 = arith.mulf %137, %142 : vector<8x32xf32>
    %c32_68 = arith.constant 32 : index
    %c0_69 = arith.constant 0 : index
    %144 = vector.load %arg4[%c32_68, %c0_69] : memref<64x128xf32, #tpu.memory_space<vmem>>, vector<8x128xf32>
    %cst_70 = arith.constant dense<0.000000e+00> : vector<8x128xf32>
    %145 = tpu.matmul %143, %82, %cst_70 {dimension_numbers = #tpu.dot_dimension_numbers<[1], [0], [0], [1], [0, 0, 1, 1], [], []>} : vector<8x32xf32>, vector<32x128xf32>, vector<8x128xf32> -> vector<8x128xf32>
    %146 = arith.addf %145, %144 : vector<8x128xf32>
    %147 = math.tanh %146 : vector<8x128xf32>
    %148 = arith.mulf %147, %85 : vector<8x128xf32>
    %149 = arith.addf %148, %88 : vector<8x128xf32>
    %150 = vector.extract_strided_slice %149 {offsets = [0, 0], sizes = [8, 32], strides = [1, 1]} : vector<8x128xf32> to vector<8x32xf32>
    %151 = vector.extract_strided_slice %149 {offsets = [0, 32], sizes = [8, 32], strides = [1, 1]} : vector<8x128xf32> to vector<8x32xf32>
    %152 = vector.extract_strided_slice %149 {offsets = [0, 64], sizes = [8, 32], strides = [1, 1]} : vector<8x128xf32> to vector<8x32xf32>
    %153 = vector.extract_strided_slice %149 {offsets = [0, 96], sizes = [8, 32], strides = [1, 1]} : vector<8x128xf32> to vector<8x32xf32>
    %154 = arith.mulf %150, %141 : vector<8x32xf32>
    %155 = arith.mulf %151, %153 : vector<8x32xf32>
    %156 = arith.addf %154, %155 : vector<8x32xf32>
    %157 = math.tanh %156 : vector<8x32xf32>
    %158 = arith.mulf %152, %157 : vector<8x32xf32>
    %c40_71 = arith.constant 40 : index
    %c0_72 = arith.constant 0 : index
    %159 = vector.load %arg4[%c40_71, %c0_72] : memref<64x128xf32, #tpu.memory_space<vmem>>, vector<8x128xf32>
    %cst_73 = arith.constant dense<0.000000e+00> : vector<8x128xf32>
    %160 = tpu.matmul %158, %82, %cst_73 {dimension_numbers = #tpu.dot_dimension_numbers<[1], [0], [0], [1], [0, 0, 1, 1], [], []>} : vector<8x32xf32>, vector<32x128xf32>, vector<8x128xf32> -> vector<8x128xf32>
    %161 = arith.addf %160, %159 : vector<8x128xf32>
    %162 = math.tanh %161 : vector<8x128xf32>
    %163 = arith.mulf %162, %85 : vector<8x128xf32>
    %164 = arith.addf %163, %88 : vector<8x128xf32>
    %165 = vector.extract_strided_slice %164 {offsets = [0, 0], sizes = [8, 32], strides = [1, 1]} : vector<8x128xf32> to vector<8x32xf32>
    %166 = vector.extract_strided_slice %164 {offsets = [0, 32], sizes = [8, 32], strides = [1, 1]} : vector<8x128xf32> to vector<8x32xf32>
    %167 = vector.extract_strided_slice %164 {offsets = [0, 64], sizes = [8, 32], strides = [1, 1]} : vector<8x128xf32> to vector<8x32xf32>
    %168 = vector.extract_strided_slice %164 {offsets = [0, 96], sizes = [8, 32], strides = [1, 1]} : vector<8x128xf32> to vector<8x32xf32>
    %169 = arith.mulf %165, %156 : vector<8x32xf32>
    %170 = arith.mulf %166, %168 : vector<8x32xf32>
    %171 = arith.addf %169, %170 : vector<8x32xf32>
    %172 = math.tanh %171 : vector<8x32xf32>
    %173 = arith.mulf %167, %172 : vector<8x32xf32>
    %c48_74 = arith.constant 48 : index
    %c0_75 = arith.constant 0 : index
    %174 = vector.load %arg4[%c48_74, %c0_75] : memref<64x128xf32, #tpu.memory_space<vmem>>, vector<8x128xf32>
    %cst_76 = arith.constant dense<0.000000e+00> : vector<8x128xf32>
    %175 = tpu.matmul %173, %82, %cst_76 {dimension_numbers = #tpu.dot_dimension_numbers<[1], [0], [0], [1], [0, 0, 1, 1], [], []>} : vector<8x32xf32>, vector<32x128xf32>, vector<8x128xf32> -> vector<8x128xf32>
    %176 = arith.addf %175, %174 : vector<8x128xf32>
    %177 = math.tanh %176 : vector<8x128xf32>
    %178 = arith.mulf %177, %85 : vector<8x128xf32>
    %179 = arith.addf %178, %88 : vector<8x128xf32>
    %180 = vector.extract_strided_slice %179 {offsets = [0, 0], sizes = [8, 32], strides = [1, 1]} : vector<8x128xf32> to vector<8x32xf32>
    %181 = vector.extract_strided_slice %179 {offsets = [0, 32], sizes = [8, 32], strides = [1, 1]} : vector<8x128xf32> to vector<8x32xf32>
    %182 = vector.extract_strided_slice %179 {offsets = [0, 64], sizes = [8, 32], strides = [1, 1]} : vector<8x128xf32> to vector<8x32xf32>
    %183 = vector.extract_strided_slice %179 {offsets = [0, 96], sizes = [8, 32], strides = [1, 1]} : vector<8x128xf32> to vector<8x32xf32>
    %184 = arith.mulf %180, %171 : vector<8x32xf32>
    %185 = arith.mulf %181, %183 : vector<8x32xf32>
    %186 = arith.addf %184, %185 : vector<8x32xf32>
    %187 = math.tanh %186 : vector<8x32xf32>
    %188 = arith.mulf %182, %187 : vector<8x32xf32>
    %c56_77 = arith.constant 56 : index
    %c0_78 = arith.constant 0 : index
    %189 = vector.load %arg4[%c56_77, %c0_78] : memref<64x128xf32, #tpu.memory_space<vmem>>, vector<8x128xf32>
    %cst_79 = arith.constant dense<0.000000e+00> : vector<8x128xf32>
    %190 = tpu.matmul %188, %82, %cst_79 {dimension_numbers = #tpu.dot_dimension_numbers<[1], [0], [0], [1], [0, 0, 1, 1], [], []>} : vector<8x32xf32>, vector<32x128xf32>, vector<8x128xf32> -> vector<8x128xf32>
    %191 = arith.addf %190, %189 : vector<8x128xf32>
    %192 = math.tanh %191 : vector<8x128xf32>
    %193 = arith.mulf %192, %85 : vector<8x128xf32>
    %194 = arith.addf %193, %88 : vector<8x128xf32>
    %195 = vector.extract_strided_slice %194 {offsets = [0, 0], sizes = [8, 32], strides = [1, 1]} : vector<8x128xf32> to vector<8x32xf32>
    %196 = vector.extract_strided_slice %194 {offsets = [0, 32], sizes = [8, 32], strides = [1, 1]} : vector<8x128xf32> to vector<8x32xf32>
    %197 = vector.extract_strided_slice %194 {offsets = [0, 64], sizes = [8, 32], strides = [1, 1]} : vector<8x128xf32> to vector<8x32xf32>
    %198 = vector.extract_strided_slice %194 {offsets = [0, 96], sizes = [8, 32], strides = [1, 1]} : vector<8x128xf32> to vector<8x32xf32>
    %199 = arith.mulf %195, %186 : vector<8x32xf32>
    %200 = arith.mulf %196, %198 : vector<8x32xf32>
    %201 = arith.addf %199, %200 : vector<8x32xf32>
    %202 = math.tanh %201 : vector<8x32xf32>
    %203 = arith.mulf %197, %202 : vector<8x32xf32>
    %c48_80 = arith.constant 48 : index
    %c0_81 = arith.constant 0 : index
    %204 = vector.load %arg2[%c48_80, %c0_81] : memref<96x128xf32, #tpu.memory_space<vmem>>, vector<32x128xf32>
    %c80 = arith.constant 80 : index
    %c0_82 = arith.constant 0 : index
    %205 = vector.load %arg2[%c80, %c0_82] : memref<96x128xf32, #tpu.memory_space<vmem>>, vector<1x128xf32>
    %cst_83 = arith.constant dense<0.000000e+00> : vector<8x128xf32>
    %206 = tpu.matmul %203, %204, %cst_83 {dimension_numbers = #tpu.dot_dimension_numbers<[1], [0], [0], [1], [0, 0, 1, 1], [], []>} : vector<8x32xf32>, vector<32x128xf32>, vector<8x128xf32> -> vector<8x128xf32>
    %207 = vector.broadcast %205 : vector<1x128xf32> to vector<8x128xf32>
    %208 = arith.addf %206, %207 : vector<8x128xf32>
    %c0_84 = arith.constant 0 : index
    %c0_85 = arith.constant 0 : index
    %209 = vector.load %arg3[%c0_84, %c0_85] : memref<8x256xf32, #tpu.memory_space<vmem>>, vector<8x128xf32>
    tpu.vector_store %arg3[%c0_84, %c0_85], %208 {strides = array<i32>} : memref<8x256xf32, #tpu.memory_space<vmem>>, vector<8x128xf32>,
    %c0_86 = arith.constant 0 : index
    %c128 = arith.constant 128 : index
    %210 = vector.load %arg3[%c0_86, %c128] : memref<8x256xf32, #tpu.memory_space<vmem>>, vector<8x32xf32>
    tpu.vector_store %arg3[%c0_86, %c128], %203 {strides = array<i32>} : memref<8x256xf32, #tpu.memory_space<vmem>>, vector<8x32xf32>,
    %c0_87 = arith.constant 0 : index
    %c160 = arith.constant 160 : index
    %211 = vector.load %arg3[%c0_87, %c160] : memref<8x256xf32, #tpu.memory_space<vmem>>, vector<8x32xf32>
    tpu.vector_store %arg3[%c0_87, %c160], %201 {strides = array<i32>} : memref<8x256xf32, #tpu.memory_space<vmem>>, vector<8x32xf32>,
    %cst_88 = arith.constant 0.000000e+00 : f32
    %212 = vector.broadcast %cst_88 : f32 to vector<8x64xf32>
    %c0_89 = arith.constant 0 : index
    %c192 = arith.constant 192 : index
    %213 = vector.load %arg3[%c0_89, %c192] : memref<8x256xf32, #tpu.memory_space<vmem>>, vector<8x64xf32>
    tpu.vector_store %arg3[%c0_89, %c192], %212 {strides = array<i32>} : memref<8x256xf32, #tpu.memory_space<vmem>>, vector<8x64xf32>,
    return
  }
  func.func @transform_0(%arg0: i32, %arg1: memref<16xi32, #tpu.memory_space<smem>>) -> (i32, i32) {
    %c0_i32 = arith.constant 0 : i32
    %c0_i32_0 = arith.constant 0 : i32
    %c0_i32_1 = arith.constant 0 : i32
    return %c0_i32, %c0_i32_0 : i32, i32
  }
  func.func @transform_1(%arg0: i32, %arg1: memref<16xi32, #tpu.memory_space<smem>>) -> (i32, i32) {
    %c0_i32 = arith.constant 0 : i32
    %c0_i32_0 = arith.constant 0 : i32
    %c0_i32_1 = arith.constant 0 : i32
    return %c0_i32, %c0_i32_0 : i32, i32
  }
}

</mosaic_0001>

<llo_original>
// kernel: tpu_custom_call.1
$region0: #{tpu_custom_call.1}
  #allocation0 [shape = 'u32[]', space=smem, size = 0x4, offset = 0x4, fixed_abs, tag = 'smem constant byte address 0x4 - core index']
  #allocation1 [shape = 'u32[144,128]{1,0:T(1,128)}', space=vmem, size = 0x12000, scoped, tag = 'internal scratch']
  #allocation2 [shape = 'f32[64,128]{1,0:T(8,128)}', space=vmem, size = 0x8000, scoped, tag = 'scratch operand']
  #allocation3 [shape = 's32[1]{0}', space=sflag, size = 0x4, scoped, tag = 'scoped memory for tpu_custom_call.1']
  #allocation4 [shape = 'u8[512]{0}', space=smem, size = 0x200, scoped, tag = 'prefetched SMEM operand 0']
  %s0 = inlined_call_operand.hbm [shape: s32[16], index: 0, kind: input, shape index: {}]
  %s1 = inlined_call_operand.hbm [shape: f32[96,128], index: 1, kind: input, shape index: {}]
  %s2 = inlined_call_operand.hbm [shape: f32[8,256], index: 2, kind: output, shape index: {}]
  %s3 = sld [smem:[#allocation0]]
  $region18: #{tpu_custom_call.1} parent=0
    _
  %s5 = ssub.s32 1, %s3
  %s6 = scalar_select 0, %s5, %s3
  %8 = dma.hbm_to_smem %s0, 16, [#allocation4], [#allocation3]
  %9 = dma.done [#allocation3], 16
  %10 = sfence
  $region1: #{tpu_custom_call.1} parent=0
    #allocation5 [shape = 'u8[49152]{0}', space=vmem, size = 0xc000, scoped, tag = 'input window, operand 1, single buffered']
    #allocation6 [shape = 's32[1]{0}', space=sflag, size = 0x4, scoped, tag = 'scoped memory for tpu_custom_call.1']
    #allocation7 [shape = 's32[1]{0}', space=sflag, size = 0x4, scoped, tag = 'scoped memory for tpu_custom_call.1']
    #allocation8 [shape = 'u8[8192]{0}', space=vmem, size = 0x2000, scoped, tag = 'output window, operand 0, single buffered']
    %11 = vsyncpa [#allocation6], 0
    %12 = vsyncpa [#allocation7], 0
    // Predicated region
    $region2: #{tpu_custom_call.1} parent=1 // pred_check
      _
    $region3: #{tpu_custom_call.1} parent=1 // pred_check_branch
      %14 = sbr.rel (0) target = $region5
    $region4: #{tpu_custom_call.1} parent=1 // pred_region
      %s16 = ssub.s32 1536, 1536
      %17 = vsyncadd [#allocation6], %s16
      %s18 = sshll.u32 [#allocation5], 4
      %s19 = int_to_ptr.vmem [resolvable:$true] %s18
      %24 = dma.hbm_to_vmem [thread:$0]  %s1, 1536, %s19, [#allocation6], 128, 128, 8
    $region5: #{tpu_custom_call.1} parent=1 // pred_fallthru
      _
    // Predicated region
    $region6: #{tpu_custom_call.1} parent=1 // pred_check
      _
    $region7: #{tpu_custom_call.1} parent=1 // pred_check_branch
      %26 = sbr.rel (0) target = $region9
    $region8: #{tpu_custom_call.1} parent=1 // pred_region
      %27 = dma.done [#allocation6], 1536
    $region9: #{tpu_custom_call.1} parent=1 // pred_fallthru
      _
    %28 = vst [vmem:[#allocation2] sm:$0xff] 0.0
    %29 = vst [vmem:[#allocation2 + $0x8] sm:$0xff] 0.0
    %30 = vst [vmem:[#allocation2 + $0x10] sm:$0xff] 0.0
    %31 = vst [vmem:[#allocation2 + $0x18] sm:$0xff] 0.0
    %32 = vst [vmem:[#allocation2 + $0x20] sm:$0xff] 0.0
    %33 = vst [vmem:[#allocation2 + $0x28] sm:$0xff] 0.0
    %34 = vst [vmem:[#allocation2 + $0x30] sm:$0xff] 0.0
    %35 = vst [vmem:[#allocation2 + $0x38] sm:$0xff] 0.0
    %s36 = sld [smem:[#allocation4]]
    %s37 = scalar_lea.vmem [#allocation5], %s36
    %v38 = vld [vmem:[%s37] sm:$0x1]
    %39 = vst [vmem:[#allocation2] sm:$0x1] %v38
    %s40 = sld [smem:[#allocation4 + $0x8]]
    %s41 = scalar_lea.vmem [#allocation5], %s40
    %v42 = vld [vmem:[%s41] sm:$0x1]
    %43 = vst [vmem:[#allocation2 + $0x1] sm:$0x1] %v42
    %s44 = sld [smem:[#allocation4 + $0x1]]
    %s45 = scalar_lea.vmem [#allocation5], %s44
    %v46 = vld [vmem:[%s45] sm:$0x1]
    %47 = vst [vmem:[#allocation2 + $0x8] sm:$0x1] %v46
    %s48 = sld [smem:[#allocation4 + $0x9]]
    %s49 = scalar_lea.vmem [#allocation5], %s48
    %v50 = vld [vmem:[%s49] sm:$0x1]
    %51 = vst [vmem:[#allocation2 + $0x9] sm:$0x1] %v50
    %s52 = sld [smem:[#allocation4 + $0x2]]
    %s53 = scalar_lea.vmem [#allocation5], %s52
    %v54 = vld [vmem:[%s53] sm:$0x1]
    %55 = vst [vmem:[#allocation2 + $0x10] sm:$0x1] %v54
    %s56 = sld [smem:[#allocation4 + $0xa]]
    %s57 = scalar_lea.vmem [#allocation5], %s56
    %v58 = vld [vmem:[%s57] sm:$0x1]
    %59 = vst [vmem:[#allocation2 + $0x11] sm:$0x1] %v58
    %s60 = sld [smem:[#allocation4 + $0x3]]
    %s61 = scalar_lea.vmem [#allocation5], %s60
    %v62 = vld [vmem:[%s61] sm:$0x1]
    %63 = vst [vmem:[#allocation2 + $0x18] sm:$0x1] %v62
    %s64 = sld [smem:[#allocation4 + $0xb]]
    %s65 = scalar_lea.vmem [#allocation5], %s64
    %v66 = vld [vmem:[%s65] sm:$0x1]
    %67 = vst [vmem:[#allocation2 + $0x19] sm:$0x1] %v66
    %s68 = sld [smem:[#allocation4 + $0x4]]
    %s69 = scalar_lea.vmem [#allocation5], %s68
    %v70 = vld [vmem:[%s69] sm:$0x1]
    %71 = vst [vmem:[#allocation2 + $0x20] sm:$0x1] %v70
    %s72 = sld [smem:[#allocation4 + $0xc]]
    %s73 = scalar_lea.vmem [#allocation5], %s72
    %v74 = vld [vmem:[%s73] sm:$0x1]
    %75 = vst [vmem:[#allocation2 + $0x21] sm:$0x1] %v74
    %s76 = sld [smem:[#allocation4 + $0x5]]
    %s77 = scalar_lea.vmem [#allocation5], %s76
    %v78 = vld [vmem:[%s77] sm:$0x1]
    %79 = vst [vmem:[#allocation2 + $0x28] sm:$0x1] %v78
    %s80 = sld [smem:[#allocation4 + $0xd]]
    %s81 = scalar_lea.vmem [#allocation5], %s80
    %v82 = vld [vmem:[%s81] sm:$0x1]
    %83 = vst [vmem:[#allocation2 + $0x29] sm:$0x1] %v82
    %s84 = sld [smem:[#allocation4 + $0x6]]
    %s85 = scalar_lea.vmem [#allocation5], %s84
    %v86 = vld [vmem:[%s85] sm:$0x1]
    %87 = vst [vmem:[#allocation2 + $0x30] sm:$0x1] %v86
    %s88 = sld [smem:[#allocation4 + $0xe]]
    %s89 = scalar_lea.vmem [#allocation5], %s88
    %v90 = vld [vmem:[%s89] sm:$0x1]
    %91 = vst [vmem:[#allocation2 + $0x31] sm:$0x1] %v90
    %s92 = sld [smem:[#allocation4 + $0x7]]
    %s93 = scalar_lea.vmem [#allocation5], %s92
    %v94 = vld [vmem:[%s93] sm:$0x1]
    %95 = vst [vmem:[#allocation2 + $0x38] sm:$0x1] %v94
    %s96 = sld [smem:[#allocation4 + $0xf]]
    %s97 = scalar_lea.vmem [#allocation5], %s96
    %v98 = vld [vmem:[%s97] sm:$0x1]
    %99 = vst [vmem:[#allocation2 + $0x39] sm:$0x1] %v98
    %v100 = vld [vmem:[#allocation5 + $0x10] sm:$0xff]
    %v101 = vld [vmem:[#allocation5 + $0x18] sm:$0xff]
    %v102 = vld [vmem:[#allocation5 + $0x20] sm:$0xff]
    %v103 = vld [vmem:[#allocation5 + $0x28] sm:$0xff]
    %v104 = vld [vmem:[#allocation5 + $0x58] sm:$0x1]
    %v105 = vlaneseq
    %v106 = vshrl.u32 %v105, 7
    %v107 = vsub.s32 0, %v106
    %v108 = vrot.slane %v104, %v107
    %v109 = vld [vmem:[#allocation5 + $0x59] sm:$0x1]
    %v110 = vlaneseq
    %v111 = vshrl.u32 %v110, 7
    %v112 = vsub.s32 0, %v111
    %v113 = vrot.slane %v109, %v112
    %v114 = vld [vmem:[#allocation2] sm:$0xff]
    %v115 = vtanh.pop %v114
    %v116 = vmul.f32 %v115, %v108
    %v117 = vadd.f32 %v116, %v113
    %119 = vrot.lane.b32.xlu0 %v117, 64
    %v120 = vpop.permute.xlu0 %119
    %v122 = vmul.f32 %v117, %v120
    %v123 = vtanh.pop %v122
    %125 = vrot.lane.b32.xlu0 %v123, 32
    %v126 = vpop.permute.xlu0 %125
    %v128 = vmul.f32 %v117, %v126
    %v129 = vld [vmem:[#allocation2 + $0x8] sm:$0xff]
    %131 = vrot.lane.b32.xlu0 %v128, 64
    %v132 = vpop.permute.xlu0 %131
    %vm133 = vcmask 261120
    %v134 = vsel %vm133, %v132, 0
    %136 = vmatprep.subr.mxu0 0.0
    %137 = vmatpush1.msra.mxu0 0.0
    %138 = vmatprep.subr.mxu0 0.0
    %139 = vmatpush1.msra.mxu0 0.0
    %140 = vmatprep.subr.mxu0 0.0
    %141 = vmatpush1.msra.mxu0 0.0
    %142 = vmatprep.subr.mxu0 0.0
    %143 = vmatpush1.msra.mxu0 0.0
    %144 = vmatprep.subr.mxu0 0.0
    %145 = vmatpush1.msra.mxu0 0.0
    %146 = vmatprep.subr.mxu0 0.0
    %147 = vmatpush1.msra.mxu0 0.0
    %148 = vmatprep.subr.mxu0 0.0
    %149 = vmatpush1.msra.mxu0 0.0
    %150 = vmatprep.subr.mxu0 0.0
    %151 = vmatpush1.msra.mxu0 0.0
    %152 = vmatprep.subr.mxu0 0.0
    %153 = vmatpush1.msra.mxu0 0.0
    %154 = vmatprep.subr.mxu0 0.0
    %155 = vmatpush1.msra.mxu0 0.0
    %156 = vmatprep.subr.mxu0 0.0
    %157 = vmatpush1.msra.mxu0 0.0
    %158 = vmatprep.subr.mxu0 0.0
    %159 = vmatpush1.msra.mxu0 0.0
    %160 = vmatprep.subr.mxu0 0.0
    %161 = vmatpush1.msra.mxu0 %v103
    %162 = vmatprep.subr.mxu0 0.0
    %163 = vmatpush1.msra.mxu0 %v102
    %164 = vmatprep.subr.mxu0 0.0
    %165 = vmatpush1.msra.mxu0 %v101
    %166 = vmatprep.subr.mxu0 0.0
    %167 = vmatpush1.msra.mxu0 %v100
    %168 = vmatprep.subr.mxu0 0.0
    %169 = vmatpush2.msra.mxu0 0.0
    %170 = vmatprep.subr.mxu0 0.0
    %171 = vmatpush2.msra.mxu0 0.0
    %172 = vmatprep.subr.mxu0 0.0
    %173 = vmatpush2.msra.mxu0 0.0
    %174 = vmatprep.subr.mxu0 0.0
    %175 = vmatpush2.msra.mxu0 0.0
    %176 = vmatprep.subr.mxu0 0.0
    %177 = vmatpush2.msra.mxu0 0.0
    %178 = vmatprep.subr.mxu0 0.0
    %179 = vmatpush2.msra.mxu0 0.0
    %180 = vmatprep.subr.mxu0 0.0
    %181 = vmatpush2.msra.mxu0 0.0
    %182 = vmatprep.subr.mxu0 0.0
    %183 = vmatpush2.msra.mxu0 0.0
    %184 = vmatprep.subr.mxu0 0.0
    %185 = vmatpush2.msra.mxu0 0.0
    %186 = vmatprep.subr.mxu0 0.0
    %187 = vmatpush2.msra.mxu0 0.0
    %188 = vmatprep.subr.mxu0 0.0
    %189 = vmatpush2.msra.mxu0 0.0
    %190 = vmatprep.subr.mxu0 0.0
    %191 = vmatpush2.msra.mxu0 0.0
    %192 = vmatprep.subr.mxu0 0.0
    %193 = vmatpush2.msra.mxu0 0.0
    %194 = vmatprep.subr.mxu0 0.0
    %195 = vmatpush2.msra.mxu0 0.0
    %196 = vmatprep.subr.mxu0 0.0
    %197 = vmatpush2.msra.mxu0 0.0
    %198 = vmatprep.subr.mxu0 0.0
    %199 = vmatpush2.msra.mxu0 0.0
    %200 = vmatprep.mubr.f32.mxu0 0.0
    %201 = vmatmul.mubr.f32.gmra.mxu0 %v134
    %v202 = vpop.f32.mrf.mxu0
    %v203 = vadd.f32 %v129, %v202
    %v204 = vpop.f32.mrf.mxu0
    %205 = vdwg.mxu0
    %v206 = vtanh.pop %v203
    %v207 = vmul.f32 %v206, %v108
    %v208 = vadd.f32 %v207, %v113
    %210 = vrot.lane.b32.xlu0 %v122, 96
    %v211 = vpop.permute.xlu0 %210
    %v213 = vmul.f32 %v208, %v211
    %215 = vrot.lane.b32.xlu0 %v208, 64
    %v216 = vpop.permute.xlu0 %215
    %v218 = vmul.f32 %v208, %v216
    %220 = vrot.lane.b32.xlu0 %v218, 96
    %v221 = vpop.permute.xlu0 %220
    %v223 = vadd.f32 %v213, %v221
    %v224 = vtanh.pop %v223
    %226 = vrot.lane.b32.xlu0 %v224, 64
    %v227 = vpop.permute.xlu0 %226
    %v229 = vmul.f32 %v208, %v227
    %v230 = vld [vmem:[#allocation2 + $0x10] sm:$0xff]
    %232 = vrot.lane.b32.xlu0 %v229, 64
    %v233 = vpop.permute.xlu0 %232
    %v234 = vsel %vm133, %v233, 0
    %236 = vmatprep.subr.mxu0 0.0
    %237 = vmatpush1.msra.mxu0 0.0
    %238 = vmatprep.subr.mxu0 0.0
    %239 = vmatpush1.msra.mxu0 0.0
    %240 = vmatprep.subr.mxu0 0.0
    %241 = vmatpush1.msra.mxu0 0.0
    %242 = vmatprep.subr.mxu0 0.0
    %243 = vmatpush1.msra.mxu0 0.0
    %244 = vmatprep.subr.mxu0 0.0
    %245 = vmatpush1.msra.mxu0 0.0
    %246 = vmatprep.subr.mxu0 0.0
    %247 = vmatpush1.msra.mxu0 0.0
    %248 = vmatprep.subr.mxu0 0.0
    %249 = vmatpush1.msra.mxu0 0.0
    %250 = vmatprep.subr.mxu0 0.0
    %251 = vmatpush1.msra.mxu0 0.0
    %252 = vmatprep.subr.mxu0 0.0
    %253 = vmatpush1.msra.mxu0 0.0
    %254 = vmatprep.subr.mxu0 0.0
    %255 = vmatpush1.msra.mxu0 0.0
    %256 = vmatprep.subr.mxu0 0.0
    %257 = vmatpush1.msra.mxu0 0.0
    %258 = vmatprep.subr.mxu0 0.0
    %259 = vmatpush1.msra.mxu0 0.0
    %260 = vmatprep.subr.mxu0 0.0
    %261 = vmatpush1.msra.mxu0 %v103
    %262 = vmatprep.subr.mxu0 0.0
    %263 = vmatpush1.msra.mxu0 %v102
    %264 = vmatprep.subr.mxu0 0.0
    %265 = vmatpush1.msra.mxu0 %v101
    %266 = vmatprep.subr.mxu0 0.0
    %267 = vmatpush1.msra.mxu0 %v100
    %268 = vmatprep.subr.mxu0 0.0
    %269 = vmatpush2.msra.mxu0 0.0
    %270 = vmatprep.subr.mxu0 0.0
    %271 = vmatpush2.msra.mxu0 0.0
    %272 = vmatprep.subr.mxu0 0.0
    %273 = vmatpush2.msra.mxu0 0.0
    %274 = vmatprep.subr.mxu0 0.0
    %275 = vmatpush2.msra.mxu0 0.0
    %276 = vmatprep.subr.mxu0 0.0
    %277 = vmatpush2.msra.mxu0 0.0
    %278 = vmatprep.subr.mxu0 0.0
    %279 = vmatpush2.msra.mxu0 0.0
    %280 = vmatprep.subr.mxu0 0.0
    %281 = vmatpush2.msra.mxu0 0.0
    %282 = vmatprep.subr.mxu0 0.0
    %283 = vmatpush2.msra.mxu0 0.0
    %284 = vmatprep.subr.mxu0 0.0
    %285 = vmatpush2.msra.mxu0 0.0
    %286 = vmatprep.subr.mxu0 0.0
    %287 = vmatpush2.msra.mxu0 0.0
    %288 = vmatprep.subr.mxu0 0.0
    %289 = vmatpush2.msra.mxu0 0.0
    %290 = vmatprep.subr.mxu0 0.0
    %291 = vmatpush2.msra.mxu0 0.0
    %292 = vmatprep.subr.mxu0 0.0
    %293 = vmatpush2.msra.mxu0 0.0
    %294 = vmatprep.subr.mxu0 0.0
    %295 = vmatpush2.msra.mxu0 0.0
    %296 = vmatprep.subr.mxu0 0.0
    %297 = vmatpush2.msra.mxu0 0.0
    %298 = vmatprep.subr.mxu0 0.0
    %299 = vmatpush2.msra.mxu0 0.0
    %300 = vmatprep.mubr.f32.mxu0 0.0
    %301 = vmatmul.mubr.f32.gmra.mxu0 %v234
    %v302 = vpop.f32.mrf.mxu0
    %v303 = vadd.f32 %v230, %v302
    %v304 = vpop.f32.mrf.mxu0
    %305 = vdwg.mxu0
    %v306 = vtanh.pop %v303
    %v307 = vmul.f32 %v306, %v108
    %v308 = vadd.f32 %v307, %v113
    %v309 = vmul.f32 %v308, %v223
    %311 = vrot.lane.b32.xlu0 %v308, 64
    %v312 = vpop.permute.xlu0 %311
    %v314 = vmul.f32 %v308, %v312
    %316 = vrot.lane.b32.xlu0 %v314, 96
    %v317 = vpop.permute.xlu0 %316
    %v319 = vadd.f32 %v309, %v317
    %v320 = vtanh.pop %v319
    %322 = vrot.lane.b32.xlu0 %v320, 64
    %v323 = vpop.permute.xlu0 %322
    %v325 = vmul.f32 %v308, %v323
    %v326 = vld [vmem:[#allocation2 + $0x18] sm:$0xff]
    %328 = vrot.lane.b32.xlu0 %v325, 64
    %v329 = vpop.permute.xlu0 %328
    %v330 = vsel %vm133, %v329, 0
    %332 = vmatprep.subr.mxu0 0.0
    %333 = vmatpush1.msra.mxu0 0.0
    %334 = vmatprep.subr.mxu0 0.0
    %335 = vmatpush1.msra.mxu0 0.0
    %336 = vmatprep.subr.mxu0 0.0
    %337 = vmatpush1.msra.mxu0 0.0
    %338 = vmatprep.subr.mxu0 0.0
    %339 = vmatpush1.msra.mxu0 0.0
    %340 = vmatprep.subr.mxu0 0.0
    %341 = vmatpush1.msra.mxu0 0.0
    %342 = vmatprep.subr.mxu0 0.0
    %343 = vmatpush1.msra.mxu0 0.0
    %344 = vmatprep.subr.mxu0 0.0
    %345 = vmatpush1.msra.mxu0 0.0
    %346 = vmatprep.subr.mxu0 0.0
    %347 = vmatpush1.msra.mxu0 0.0
    %348 = vmatprep.subr.mxu0 0.0
    %349 = vmatpush1.msra.mxu0 0.0
    %350 = vmatprep.subr.mxu0 0.0
    %351 = vmatpush1.msra.mxu0 0.0
    %352 = vmatprep.subr.mxu0 0.0
    %353 = vmatpush1.msra.mxu0 0.0
    %354 = vmatprep.subr.mxu0 0.0
    %355 = vmatpush1.msra.mxu0 0.0
    %356 = vmatprep.subr.mxu0 0.0
    %357 = vmatpush1.msra.mxu0 %v103
    %358 = vmatprep.subr.mxu0 0.0
    %359 = vmatpush1.msra.mxu0 %v102
    %360 = vmatprep.subr.mxu0 0.0
    %361 = vmatpush1.msra.mxu0 %v101
    %362 = vmatprep.subr.mxu0 0.0
    %363 = vmatpush1.msra.mxu0 %v100
    %364 = vmatprep.subr.mxu0 0.0
    %365 = vmatpush2.msra.mxu0 0.0
    %366 = vmatprep.subr.mxu0 0.0
    %367 = vmatpush2.msra.mxu0 0.0
    %368 = vmatprep.subr.mxu0 0.0
    %369 = vmatpush2.msra.mxu0 0.0
    %370 = vmatprep.subr.mxu0 0.0
    %371 = vmatpush2.msra.mxu0 0.0
    %372 = vmatprep.subr.mxu0 0.0
    %373 = vmatpush2.msra.mxu0 0.0
    %374 = vmatprep.subr.mxu0 0.0
    %375 = vmatpush2.msra.mxu0 0.0
    %376 = vmatprep.subr.mxu0 0.0
    %377 = vmatpush2.msra.mxu0 0.0
    %378 = vmatprep.subr.mxu0 0.0
    %379 = vmatpush2.msra.mxu0 0.0
    %380 = vmatprep.subr.mxu0 0.0
    %381 = vmatpush2.msra.mxu0 0.0
    %382 = vmatprep.subr.mxu0 0.0
    %383 = vmatpush2.msra.mxu0 0.0
    %384 = vmatprep.subr.mxu0 0.0
    %385 = vmatpush2.msra.mxu0 0.0
    %386 = vmatprep.subr.mxu0 0.0
    %387 = vmatpush2.msra.mxu0 0.0
    %388 = vmatprep.subr.mxu0 0.0
    %389 = vmatpush2.msra.mxu0 0.0
    %390 = vmatprep.subr.mxu0 0.0
    %391 = vmatpush2.msra.mxu0 0.0
    %392 = vmatprep.subr.mxu0 0.0
    %393 = vmatpush2.msra.mxu0 0.0
    %394 = vmatprep.subr.mxu0 0.0
    %395 = vmatpush2.msra.mxu0 0.0
    %396 = vmatprep.mubr.f32.mxu0 0.0
    %397 = vmatmul.mubr.f32.gmra.mxu0 %v330
    %v398 = vpop.f32.mrf.mxu0
    %v399 = vadd.f32 %v326, %v398
    %v400 = vpop.f32.mrf.mxu0
    %401 = vdwg.mxu0
    %v402 = vtanh.pop %v399
    %v403 = vmul.f32 %v402, %v108
    %v404 = vadd.f32 %v403, %v113
    %v405 = vmul.f32 %v404, %v319
    %407 = vrot.lane.b32.xlu0 %v404, 64
    %v408 = vpop.permute.xlu0 %407
    %v410 = vmul.f32 %v404, %v408
    %412 = vrot.lane.b32.xlu0 %v410, 96
    %v413 = vpop.permute.xlu0 %412
    %v415 = vadd.f32 %v405, %v413
    %v416 = vtanh.pop %v415
    %418 = vrot.lane.b32.xlu0 %v416, 64
    %v419 = vpop.permute.xlu0 %418
    %v421 = vmul.f32 %v404, %v419
    %v422 = vld [vmem:[#allocation2 + $0x20] sm:$0xff]
    %424 = vrot.lane.b32.xlu0 %v421, 64
    %v425 = vpop.permute.xlu0 %424
    %v426 = vsel %vm133, %v425, 0
    %428 = vmatprep.subr.mxu0 0.0
    %429 = vmatpush1.msra.mxu0 0.0
    %430 = vmatprep.subr.mxu0 0.0
    %431 = vmatpush1.msra.mxu0 0.0
    %432 = vmatprep.subr.mxu0 0.0
    %433 = vmatpush1.msra.mxu0 0.0
    %434 = vmatprep.subr.mxu0 0.0
    %435 = vmatpush1.msra.mxu0 0.0
    %436 = vmatprep.subr.mxu0 0.0
    %437 = vmatpush1.msra.mxu0 0.0
    %438 = vmatprep.subr.mxu0 0.0
    %439 = vmatpush1.msra.mxu0 0.0
    %440 = vmatprep.subr.mxu0 0.0
    %441 = vmatpush1.msra.mxu0 0.0
    %442 = vmatprep.subr.mxu0 0.0
    %443 = vmatpush1.msra.mxu0 0.0
    %444 = vmatprep.subr.mxu0 0.0
    %445 = vmatpush1.msra.mxu0 0.0
    %446 = vmatprep.subr.mxu0 0.0
    %447 = vmatpush1.msra.mxu0 0.0
    %448 = vmatprep.subr.mxu0 0.0
    %449 = vmatpush1.msra.mxu0 0.0
    %450 = vmatprep.subr.mxu0 0.0
    %451 = vmatpush1.msra.mxu0 0.0
    %452 = vmatprep.subr.mxu0 0.0
    %453 = vmatpush1.msra.mxu0 %v103
    %454 = vmatprep.subr.mxu0 0.0
    %455 = vmatpush1.msra.mxu0 %v102
    %456 = vmatprep.subr.mxu0 0.0
    %457 = vmatpush1.msra.mxu0 %v101
    %458 = vmatprep.subr.mxu0 0.0
    %459 = vmatpush1.msra.mxu0 %v100
    %460 = vmatprep.subr.mxu0 0.0
    %461 = vmatpush2.msra.mxu0 0.0
    %462 = vmatprep.subr.mxu0 0.0
    %463 = vmatpush2.msra.mxu0 0.0
    %464 = vmatprep.subr.mxu0 0.0
    %465 = vmatpush2.msra.mxu0 0.0
    %466 = vmatprep.subr.mxu0 0.0
    %467 = vmatpush2.msra.mxu0 0.0
    %468 = vmatprep.subr.mxu0 0.0
    %469 = vmatpush2.msra.mxu0 0.0
    %470 = vmatprep.subr.mxu0 0.0
    %471 = vmatpush2.msra.mxu0 0.0
    %472 = vmatprep.subr.mxu0 0.0
    %473 = vmatpush2.msra.mxu0 0.0
    %474 = vmatprep.subr.mxu0 0.0
    %475 = vmatpush2.msra.mxu0 0.0
    %476 = vmatprep.subr.mxu0 0.0
    %477 = vmatpush2.msra.mxu0 0.0
    %478 = vmatprep.subr.mxu0 0.0
    %479 = vmatpush2.msra.mxu0 0.0
    %480 = vmatprep.subr.mxu0 0.0
    %481 = vmatpush2.msra.mxu0 0.0
    %482 = vmatprep.subr.mxu0 0.0
    %483 = vmatpush2.msra.mxu0 0.0
    %484 = vmatprep.subr.mxu0 0.0
    %485 = vmatpush2.msra.mxu0 0.0
    %486 = vmatprep.subr.mxu0 0.0
    %487 = vmatpush2.msra.mxu0 0.0
    %488 = vmatprep.subr.mxu0 0.0
    %489 = vmatpush2.msra.mxu0 0.0
    %490 = vmatprep.subr.mxu0 0.0
    %491 = vmatpush2.msra.mxu0 0.0
    %492 = vmatprep.mubr.f32.mxu0 0.0
    %493 = vmatmul.mubr.f32.gmra.mxu0 %v426
    %v494 = vpop.f32.mrf.mxu0
    %v495 = vadd.f32 %v422, %v494
    %v496 = vpop.f32.mrf.mxu0
    %497 = vdwg.mxu0
    %v498 = vtanh.pop %v495
    %v499 = vmul.f32 %v498, %v108
    %v500 = vadd.f32 %v499, %v113
    %v501 = vmul.f32 %v500, %v415
    %503 = vrot.lane.b32.xlu0 %v500, 64
    %v504 = vpop.permute.xlu0 %503
    %v506 = vmul.f32 %v500, %v504
    %508 = vrot.lane.b32.xlu0 %v506, 96
    %v509 = vpop.permute.xlu0 %508
    %v511 = vadd.f32 %v501, %v509
    %v512 = vtanh.pop %v511
    %514 = vrot.lane.b32.xlu0 %v512, 64
    %v515 = vpop.permute.xlu0 %514
    %v517 = vmul.f32 %v500, %v515
    %v518 = vld [vmem:[#allocation2 + $0x28] sm:$0xff]
    %520 = vrot.lane.b32.xlu0 %v517, 64
    %v521 = vpop.permute.xlu0 %520
    %v522 = vsel %vm133, %v521, 0
    %524 = vmatprep.subr.mxu0 0.0
    %525 = vmatpush1.msra.mxu0 0.0
    %526 = vmatprep.subr.mxu0 0.0
    %527 = vmatpush1.msra.mxu0 0.0
    %528 = vmatprep.subr.mxu0 0.0
    %529 = vmatpush1.msra.mxu0 0.0
    %530 = vmatprep.subr.mxu0 0.0
    %531 = vmatpush1.msra.mxu0 0.0
    %532 = vmatprep.subr.mxu0 0.0
    %533 = vmatpush1.msra.mxu0 0.0
    %534 = vmatprep.subr.mxu0 0.0
    %535 = vmatpush1.msra.mxu0 0.0
    %536 = vmatprep.subr.mxu0 0.0
    %537 = vmatpush1.msra.mxu0 0.0
    %538 = vmatprep.subr.mxu0 0.0
    %539 = vmatpush1.msra.mxu0 0.0
    %540 = vmatprep.subr.mxu0 0.0
    %541 = vmatpush1.msra.mxu0 0.0
    %542 = vmatprep.subr.mxu0 0.0
    %543 = vmatpush1.msra.mxu0 0.0
    %544 = vmatprep.subr.mxu0 0.0
    %545 = vmatpush1.msra.mxu0 0.0
    %546 = vmatprep.subr.mxu0 0.0
    %547 = vmatpush1.msra.mxu0 0.0
    %548 = vmatprep.subr.mxu0 0.0
    %549 = vmatpush1.msra.mxu0 %v103
    %550 = vmatprep.subr.mxu0 0.0
    %551 = vmatpush1.msra.mxu0 %v102
    %552 = vmatprep.subr.mxu0 0.0
    %553 = vmatpush1.msra.mxu0 %v101
    %554 = vmatprep.subr.mxu0 0.0
    %555 = vmatpush1.msra.mxu0 %v100
    %556 = vmatprep.subr.mxu0 0.0
    %557 = vmatpush2.msra.mxu0 0.0
    %558 = vmatprep.subr.mxu0 0.0
    %559 = vmatpush2.msra.mxu0 0.0
    %560 = vmatprep.subr.mxu0 0.0
    %561 = vmatpush2.msra.mxu0 0.0
    %562 = vmatprep.subr.mxu0 0.0
    %563 = vmatpush2.msra.mxu0 0.0
    %564 = vmatprep.subr.mxu0 0.0
    %565 = vmatpush2.msra.mxu0 0.0
    %566 = vmatprep.subr.mxu0 0.0
    %567 = vmatpush2.msra.mxu0 0.0
    %568 = vmatprep.subr.mxu0 0.0
    %569 = vmatpush2.msra.mxu0 0.0
    %570 = vmatprep.subr.mxu0 0.0
    %571 = vmatpush2.msra.mxu0 0.0
    %572 = vmatprep.subr.mxu0 0.0
    %573 = vmatpush2.msra.mxu0 0.0
    %574 = vmatprep.subr.mxu0 0.0
    %575 = vmatpush2.msra.mxu0 0.0
    %576 = vmatprep.subr.mxu0 0.0
    %577 = vmatpush2.msra.mxu0 0.0
    %578 = vmatprep.subr.mxu0 0.0
    %579 = vmatpush2.msra.mxu0 0.0
    %580 = vmatprep.subr.mxu0 0.0
    %581 = vmatpush2.msra.mxu0 0.0
    %582 = vmatprep.subr.mxu0 0.0
    %583 = vmatpush2.msra.mxu0 0.0
    %584 = vmatprep.subr.mxu0 0.0
    %585 = vmatpush2.msra.mxu0 0.0
    %586 = vmatprep.subr.mxu0 0.0
    %587 = vmatpush2.msra.mxu0 0.0
    %588 = vmatprep.mubr.f32.mxu0 0.0
    %589 = vmatmul.mubr.f32.gmra.mxu0 %v522
    %v590 = vpop.f32.mrf.mxu0
    %v591 = vadd.f32 %v518, %v590
    %v592 = vpop.f32.mrf.mxu0
    %593 = vdwg.mxu0
    %v594 = vtanh.pop %v591
    %v595 = vmul.f32 %v594, %v108
    %v596 = vadd.f32 %v595, %v113
    %v597 = vmul.f32 %v596, %v511
    %599 = vrot.lane.b32.xlu0 %v596, 64
    %v600 = vpop.permute.xlu0 %599
    %v602 = vmul.f32 %v596, %v600
    %604 = vrot.lane.b32.xlu0 %v602, 96
    %v605 = vpop.permute.xlu0 %604
    %v607 = vadd.f32 %v597, %v605
    %v608 = vtanh.pop %v607
    %610 = vrot.lane.b32.xlu0 %v608, 64
    %v611 = vpop.permute.xlu0 %610
    %v613 = vmul.f32 %v596, %v611
    %v614 = vld [vmem:[#allocation2 + $0x30] sm:$0xff]
    %616 = vrot.lane.b32.xlu0 %v613, 64
    %v617 = vpop.permute.xlu0 %616
    %v618 = vsel %vm133, %v617, 0
    %620 = vmatprep.subr.mxu0 0.0
    %621 = vmatpush1.msra.mxu0 0.0
    %622 = vmatprep.subr.mxu0 0.0
    %623 = vmatpush1.msra.mxu0 0.0
    %624 = vmatprep.subr.mxu0 0.0
    %625 = vmatpush1.msra.mxu0 0.0
    %626 = vmatprep.subr.mxu0 0.0
    %627 = vmatpush1.msra.mxu0 0.0
    %628 = vmatprep.subr.mxu0 0.0
    %629 = vmatpush1.msra.mxu0 0.0
    %630 = vmatprep.subr.mxu0 0.0
    %631 = vmatpush1.msra.mxu0 0.0
    %632 = vmatprep.subr.mxu0 0.0
    %633 = vmatpush1.msra.mxu0 0.0
    %634 = vmatprep.subr.mxu0 0.0
    %635 = vmatpush1.msra.mxu0 0.0
    %636 = vmatprep.subr.mxu0 0.0
    %637 = vmatpush1.msra.mxu0 0.0
    %638 = vmatprep.subr.mxu0 0.0
    %639 = vmatpush1.msra.mxu0 0.0
    %640 = vmatprep.subr.mxu0 0.0
    %641 = vmatpush1.msra.mxu0 0.0
    %642 = vmatprep.subr.mxu0 0.0
    %643 = vmatpush1.msra.mxu0 0.0
    %644 = vmatprep.subr.mxu0 0.0
    %645 = vmatpush1.msra.mxu0 %v103
    %646 = vmatprep.subr.mxu0 0.0
    %647 = vmatpush1.msra.mxu0 %v102
    %648 = vmatprep.subr.mxu0 0.0
    %649 = vmatpush1.msra.mxu0 %v101
    %650 = vmatprep.subr.mxu0 0.0
    %651 = vmatpush1.msra.mxu0 %v100
    %652 = vmatprep.subr.mxu0 0.0
    %653 = vmatpush2.msra.mxu0 0.0
    %654 = vmatprep.subr.mxu0 0.0
    %655 = vmatpush2.msra.mxu0 0.0
    %656 = vmatprep.subr.mxu0 0.0
    %657 = vmatpush2.msra.mxu0 0.0
    %658 = vmatprep.subr.mxu0 0.0
    %659 = vmatpush2.msra.mxu0 0.0
    %660 = vmatprep.subr.mxu0 0.0
    %661 = vmatpush2.msra.mxu0 0.0
    %662 = vmatprep.subr.mxu0 0.0
    %663 = vmatpush2.msra.mxu0 0.0
    %664 = vmatprep.subr.mxu0 0.0
    %665 = vmatpush2.msra.mxu0 0.0
    %666 = vmatprep.subr.mxu0 0.0
    %667 = vmatpush2.msra.mxu0 0.0
    %668 = vmatprep.subr.mxu0 0.0
    %669 = vmatpush2.msra.mxu0 0.0
    %670 = vmatprep.subr.mxu0 0.0
    %671 = vmatpush2.msra.mxu0 0.0
    %672 = vmatprep.subr.mxu0 0.0
    %673 = vmatpush2.msra.mxu0 0.0
    %674 = vmatprep.subr.mxu0 0.0
    %675 = vmatpush2.msra.mxu0 0.0
    %676 = vmatprep.subr.mxu0 0.0
    %677 = vmatpush2.msra.mxu0 0.0
    %678 = vmatprep.subr.mxu0 0.0
    %679 = vmatpush2.msra.mxu0 0.0
    %680 = vmatprep.subr.mxu0 0.0
    %681 = vmatpush2.msra.mxu0 0.0
    %682 = vmatprep.subr.mxu0 0.0
    %683 = vmatpush2.msra.mxu0 0.0
    %684 = vmatprep.mubr.f32.mxu0 0.0
    %685 = vmatmul.mubr.f32.gmra.mxu0 %v618
    %v686 = vpop.f32.mrf.mxu0
    %v687 = vadd.f32 %v614, %v686
    %v688 = vpop.f32.mrf.mxu0
    %689 = vdwg.mxu0
    %v690 = vtanh.pop %v687
    %v691 = vmul.f32 %v690, %v108
    %v692 = vadd.f32 %v691, %v113
    %v693 = vmul.f32 %v692, %v607
    %695 = vrot.lane.b32.xlu0 %v692, 64
    %v696 = vpop.permute.xlu0 %695
    %v698 = vmul.f32 %v692, %v696
    %700 = vrot.lane.b32.xlu0 %v698, 96
    %v701 = vpop.permute.xlu0 %700
    %v703 = vadd.f32 %v693, %v701
    %v704 = vtanh.pop %v703
    %706 = vrot.lane.b32.xlu0 %v704, 64
    %v707 = vpop.permute.xlu0 %706
    %v709 = vmul.f32 %v692, %v707
    %v710 = vld [vmem:[#allocation2 + $0x38] sm:$0xff]
    %712 = vrot.lane.b32.xlu0 %v709, 64
    %v713 = vpop.permute.xlu0 %712
    %v714 = vsel %vm133, %v713, 0
    %716 = vmatprep.subr.mxu0 0.0
    %717 = vmatpush1.msra.mxu0 0.0
    %718 = vmatprep.subr.mxu0 0.0
    %719 = vmatpush1.msra.mxu0 0.0
    %720 = vmatprep.subr.mxu0 0.0
    %721 = vmatpush1.msra.mxu0 0.0
    %722 = vmatprep.subr.mxu0 0.0
    %723 = vmatpush1.msra.mxu0 0.0
    %724 = vmatprep.subr.mxu0 0.0
    %725 = vmatpush1.msra.mxu0 0.0
    %726 = vmatprep.subr.mxu0 0.0
    %727 = vmatpush1.msra.mxu0 0.0
    %728 = vmatprep.subr.mxu0 0.0
    %729 = vmatpush1.msra.mxu0 0.0
    %730 = vmatprep.subr.mxu0 0.0
    %731 = vmatpush1.msra.mxu0 0.0
    %732 = vmatprep.subr.mxu0 0.0
    %733 = vmatpush1.msra.mxu0 0.0
    %734 = vmatprep.subr.mxu0 0.0
    %735 = vmatpush1.msra.mxu0 0.0
    %736 = vmatprep.subr.mxu0 0.0
    %737 = vmatpush1.msra.mxu0 0.0
    %738 = vmatprep.subr.mxu0 0.0
    %739 = vmatpush1.msra.mxu0 0.0
    %740 = vmatprep.subr.mxu0 0.0
    %741 = vmatpush1.msra.mxu0 %v103
    %742 = vmatprep.subr.mxu0 0.0
    %743 = vmatpush1.msra.mxu0 %v102
    %744 = vmatprep.subr.mxu0 0.0
    %745 = vmatpush1.msra.mxu0 %v101
    %746 = vmatprep.subr.mxu0 0.0
    %747 = vmatpush1.msra.mxu0 %v100
    %748 = vmatprep.subr.mxu0 0.0
    %749 = vmatpush2.msra.mxu0 0.0
    %750 = vmatprep.subr.mxu0 0.0
    %751 = vmatpush2.msra.mxu0 0.0
    %752 = vmatprep.subr.mxu0 0.0
    %753 = vmatpush2.msra.mxu0 0.0
    %754 = vmatprep.subr.mxu0 0.0
    %755 = vmatpush2.msra.mxu0 0.0
    %756 = vmatprep.subr.mxu0 0.0
    %757 = vmatpush2.msra.mxu0 0.0
    %758 = vmatprep.subr.mxu0 0.0
    %759 = vmatpush2.msra.mxu0 0.0
    %760 = vmatprep.subr.mxu0 0.0
    %761 = vmatpush2.msra.mxu0 0.0
    %762 = vmatprep.subr.mxu0 0.0
    %763 = vmatpush2.msra.mxu0 0.0
    %764 = vmatprep.subr.mxu0 0.0
    %765 = vmatpush2.msra.mxu0 0.0
    %766 = vmatprep.subr.mxu0 0.0
    %767 = vmatpush2.msra.mxu0 0.0
    %768 = vmatprep.subr.mxu0 0.0
    %769 = vmatpush2.msra.mxu0 0.0
    %770 = vmatprep.subr.mxu0 0.0
    %771 = vmatpush2.msra.mxu0 0.0
    %772 = vmatprep.subr.mxu0 0.0
    %773 = vmatpush2.msra.mxu0 0.0
    %774 = vmatprep.subr.mxu0 0.0
    %775 = vmatpush2.msra.mxu0 0.0
    %776 = vmatprep.subr.mxu0 0.0
    %777 = vmatpush2.msra.mxu0 0.0
    %778 = vmatprep.subr.mxu0 0.0
    %779 = vmatpush2.msra.mxu0 0.0
    %780 = vmatprep.mubr.f32.mxu0 0.0
    %781 = vmatmul.mubr.f32.gmra.mxu0 %v714
    %v782 = vpop.f32.mrf.mxu0
    %v783 = vadd.f32 %v710, %v782
    %v784 = vpop.f32.mrf.mxu0
    %785 = vdwg.mxu0
    %v786 = vtanh.pop %v783
    %v787 = vmul.f32 %v786, %v108
    %v788 = vadd.f32 %v787, %v113
    %v789 = vmul.f32 %v788, %v703
    %791 = vrot.lane.b32.xlu0 %v788, 64
    %v792 = vpop.permute.xlu0 %791
    %v794 = vmul.f32 %v788, %v792
    %796 = vrot.lane.b32.xlu0 %v794, 96
    %v797 = vpop.permute.xlu0 %796
    %v799 = vadd.f32 %v789, %v797
    %v800 = vtanh.pop %v799
    %802 = vrot.lane.b32.xlu0 %v800, 64
    %v803 = vpop.permute.xlu0 %802
    %v805 = vmul.f32 %v788, %v803
    %v806 = vld [vmem:[#allocation5 + $0x30] sm:$0xff]
    %v807 = vld [vmem:[#allocation5 + $0x38] sm:$0xff]
    %v808 = vld [vmem:[#allocation5 + $0x40] sm:$0xff]
    %v809 = vld [vmem:[#allocation5 + $0x48] sm:$0xff]
    %v810 = vld [vmem:[#allocation5 + $0x50] sm:$0x1]
    %v811 = vlaneseq
    %v812 = vshrl.u32 %v811, 7
    %v813 = vsub.s32 0, %v812
    %v814 = vrot.slane %v810, %v813
    %816 = vrot.lane.b32.xlu0 %v805, 64
    %v817 = vpop.permute.xlu0 %816
    %v818 = vsel %vm133, %v817, 0
    %820 = vmatprep.subr.mxu0 0.0
    %821 = vmatpush1.msra.mxu0 0.0
    %822 = vmatprep.subr.mxu0 0.0
    %823 = vmatpush1.msra.mxu0 0.0
    %824 = vmatprep.subr.mxu0 0.0
    %825 = vmatpush1.msra.mxu0 0.0
    %826 = vmatprep.subr.mxu0 0.0
    %827 = vmatpush1.msra.mxu0 0.0
    %828 = vmatprep.subr.mxu0 0.0
    %829 = vmatpush1.msra.mxu0 0.0
    %830 = vmatprep.subr.mxu0 0.0
    %831 = vmatpush1.msra.mxu0 0.0
    %832 = vmatprep.subr.mxu0 0.0
    %833 = vmatpush1.msra.mxu0 0.0
    %834 = vmatprep.subr.mxu0 0.0
    %835 = vmatpush1.msra.mxu0 0.0
    %836 = vmatprep.subr.mxu0 0.0
    %837 = vmatpush1.msra.mxu0 0.0
    %838 = vmatprep.subr.mxu0 0.0
    %839 = vmatpush1.msra.mxu0 0.0
    %840 = vmatprep.subr.mxu0 0.0
    %841 = vmatpush1.msra.mxu0 0.0
    %842 = vmatprep.subr.mxu0 0.0
    %843 = vmatpush1.msra.mxu0 0.0
    %844 = vmatprep.subr.mxu0 0.0
    %845 = vmatpush1.msra.mxu0 %v809
    %846 = vmatprep.subr.mxu0 0.0
    %847 = vmatpush1.msra.mxu0 %v808
    %848 = vmatprep.subr.mxu0 0.0
    %849 = vmatpush1.msra.mxu0 %v807
    %850 = vmatprep.subr.mxu0 0.0
    %851 = vmatpush1.msra.mxu0 %v806
    %852 = vmatprep.subr.mxu0 0.0
    %853 = vmatpush2.msra.mxu0 0.0
    %854 = vmatprep.subr.mxu0 0.0
    %855 = vmatpush2.msra.mxu0 0.0
    %856 = vmatprep.subr.mxu0 0.0
    %857 = vmatpush2.msra.mxu0 0.0
    %858 = vmatprep.subr.mxu0 0.0
    %859 = vmatpush2.msra.mxu0 0.0
    %860 = vmatprep.subr.mxu0 0.0
    %861 = vmatpush2.msra.mxu0 0.0
    %862 = vmatprep.subr.mxu0 0.0
    %863 = vmatpush2.msra.mxu0 0.0
    %864 = vmatprep.subr.mxu0 0.0
    %865 = vmatpush2.msra.mxu0 0.0
    %866 = vmatprep.subr.mxu0 0.0
    %867 = vmatpush2.msra.mxu0 0.0
    %868 = vmatprep.subr.mxu0 0.0
    %869 = vmatpush2.msra.mxu0 0.0
    %870 = vmatprep.subr.mxu0 0.0
    %871 = vmatpush2.msra.mxu0 0.0
    %872 = vmatprep.subr.mxu0 0.0
    %873 = vmatpush2.msra.mxu0 0.0
    %874 = vmatprep.subr.mxu0 0.0
    %875 = vmatpush2.msra.mxu0 0.0
    %876 = vmatprep.subr.mxu0 0.0
    %877 = vmatpush2.msra.mxu0 0.0
    %878 = vmatprep.subr.mxu0 0.0
    %879 = vmatpush2.msra.mxu0 0.0
    %880 = vmatprep.subr.mxu0 0.0
    %881 = vmatpush2.msra.mxu0 0.0
    %882 = vmatprep.subr.mxu0 0.0
    %883 = vmatpush2.msra.mxu0 0.0
    %884 = vmatprep.mubr.f32.mxu0 0.0
    %885 = vmatmul.mubr.f32.gmra.mxu0 %v818
    %v886 = vpop.f32.mrf.mxu0
    %v887 = vadd.f32 %v814, %v886
    %v888 = vpop.f32.mrf.mxu0
    %889 = vdwg.mxu0
    %890 = vst [vmem:[#allocation8] sm:$0xff] %v887
    %892 = vst.msk [vmem:[#allocation8 + $0x8] sm:$0xff] %vm133, %v817
    %894 = vrot.lane.b32.xlu0 %v799, 32
    %v895 = vpop.permute.xlu0 %894
    %vm897 = vcmask 523520
    %898 = vst.msk [vmem:[#allocation8 + $0x8] sm:$0xff] %vm897, %v895
    %vm899 = vcmask 1048064
    %900 = vst.msk [vmem:[#allocation8 + $0x8] sm:$0xff] %vm899, 0.0
    // Predicated region
    $region10: #{tpu_custom_call.1} parent=1 // pred_check
      _
    $region11: #{tpu_custom_call.1} parent=1 // pred_check_branch
      %902 = sbr.rel (0) target = $region13
    $region12: #{tpu_custom_call.1} parent=1 // pred_region
      %s904 = ssub.s32 256, 256
      %905 = vsyncadd [#allocation7], %s904
      %s907 = sshll.u32 [#allocation8], 4
      %s908 = int_to_ptr.vmem [resolvable:$true] %s907
      %910 = dma.vmem_to_hbm [thread:$0]  %s908, 256, %s2, [#allocation7]
    $region13: #{tpu_custom_call.1} parent=1 // pred_fallthru
      _
    // Predicated region
    $region14: #{tpu_custom_call.1} parent=1 // pred_check
      _
    $region15: #{tpu_custom_call.1} parent=1 // pred_check_branch
      %912 = sbr.rel (0) target = $region17
    $region16: #{tpu_custom_call.1} parent=1 // pred_region
      %913 = dma.done [#allocation7], 256
    $region17: #{tpu_custom_call.1} parent=1 // pred_fallthru
      _
    %914 = vsyncpa [#allocation6], 1
    %915 = vsyncpa [#allocation7], 1

</llo_original>
